<compile_context>
chip_gen: v7x
topology: tpu7x:2x2x1
jax: 0.10.0
libtpu: 0.0.40
codegen_flags: <defaults>
</compile_context>

<pallas_src>
import jax
import jax.numpy as jnp
from jax import lax
from jax.experimental import pallas as pl
from jax.experimental.pallas import tpu as pltpu


def _xent_kernel(labels_ref, logits_ref, out_ref):
    """One tile: (TN, C) labels/logits -> (1, TN) per-row losses (f32, lane-dense)."""
    labels = labels_ref[...]                       # native dtype (bf16 stays bf16)
    logits = logits_ref[...].astype(jnp.float32)
    C = logits.shape[-1]

    # Row-wise max (XLU) and stable shift; exp over the whole tile (EUP).
    m = jnp.max(logits, axis=-1, keepdims=True)    # (TN, 1)
    shifted = logits - m                           # (TN, C), <= 0
    e = jnp.exp(shifted)                           # (TN, C)

    # Lane-dense class-axis reductions on the (otherwise idle) MXU:
    #   dot_general(ones(1, C), X(TN, C)) contracting the last axes -> (1, TN)
    # (the q @ k.T pattern).  Rows land on lanes, so the epilogue and the store are dense.
    dn = (((1,), (1,)), ((), ()))
    ones_f32 = jnp.ones((1, C), jnp.float32)       # tiny (1 vreg-ish) constant
    se_t = lax.dot_general(ones_f32, e, dn, preferred_element_type=jnp.float32)
    ls_t = lax.dot_general(ones_f32, labels.astype(jnp.float32) * shifted, dn,
                           preferred_element_type=jnp.float32)
    # sum(labels): labels fed to the MXU in their native dtype, f32 accumulate.
    ones_lbl = jnp.ones((1, C), labels.dtype)
    sl_t = lax.dot_general(ones_lbl, labels, dn, preferred_element_type=jnp.float32)

    # loss = sum(labels) * log(sum(exp(shifted))) - sum(labels * shifted)   -- (1, TN)
    out_ref[...] = (sl_t * jnp.log(se_t) - ls_t).astype(out_ref.dtype)


def _round_down(x, m):
    return (x // m) * m


def softmax_cross_entropy_with_logits(labels, logits, *, tile_rows=4096,
                                       vmem_target_bytes=24 * 1024 * 1024):
    """(-labels * log_softmax(logits, -1)).sum(-1) computed in a Pallas TPU kernel.

    Accepts any floating dtype (f32/bf16) for labels/logits; internal math is f32; the
    result dtype is result_type(labels, logits) (PyTorch parity).
    """
    assert labels.shape == logits.shape, "labels and logits must match in shape"
    *lead, C = logits.shape
    N = 1
    for d in lead:
        N *= d
    out_dtype = jnp.result_type(labels.dtype, logits.dtype)

    labels2d = labels.reshape(N, C)
    logits2d = logits.reshape(N, C)

    # --- Row-tile size --------------------------------------------------------------
    # Working set per row (bytes): 2 inputs x 2 pipeline buffers at input itemsize,
    # plus ~4 f32 temporaries inside the kernel (logits_f32 / shifted / exp / labels*shifted).
    in_itemsize = max(labels2d.dtype.itemsize, logits2d.dtype.itemsize)
    bytes_per_row = 2 * 2 * C * in_itemsize + 4 * C * 4 + 16
    tn = min(tile_rows, max(128, _round_down(vmem_target_bytes // bytes_per_row, 128)))
    tn = max(128, _round_down(tn, 128))

    if N <= tn:
        # Single block covering all rows: full-array blocks, no padding, no ragged edge.
        tn = N
        num_tiles = 1
    else:
        num_tiles = pl.cdiv(N, tn)
        # Ragged last block: Pallas clips the input DMA; garbage rows only affect output
        # lanes >= N, which are sliced away below.  No jnp.pad HBM copy of the inputs.

    working_set = (2 * 2 * tn * C * in_itemsize      # double-buffered input windows
                   + 4 * tn * C * 4                  # f32 temporaries
                   + 4 * tn + (1 << 20))             # output + slack
    vmem_limit = int(min(56 * 1024 * 1024, max(2 * working_set, 16 * 1024 * 1024)))

    out2d = pl.pallas_call(
        _xent_kernel,
        out_shape=jax.ShapeDtypeStruct((num_tiles, tn), jnp.float32),
        grid_spec=pltpu.PrefetchScalarGridSpec(
            num_scalar_prefetch=0,
            grid=(num_tiles,),
            in_specs=[
                pl.BlockSpec((tn, C), lambda i: (i, 0)),   # labels tile
                pl.BlockSpec((tn, C), lambda i: (i, 0)),   # logits tile
            ],
            # Lane-dense per-row losses: one (1, tn) row per grid step.
            out_specs=pl.BlockSpec((1, tn), lambda i: (i, 0)),
        ),
        compiler_params=pltpu.CompilerParams(
            dimension_semantics=("parallel",),
            vmem_limit_bytes=vmem_limit,
        ),
    )(labels2d, logits2d)

    out = out2d.reshape(-1)[:N].reshape(tuple(lead))
    return out.astype(out_dtype)


if __name__ == "__main__":
    key = jax.random.PRNGKey(0)
    k1, k2, k3, k4, k5, k6 = jax.random.split(key, 6)

    # Case 1: f32, batch=2, seq=8, classes=128 -> N=16 rows (single-block path).
    B, S, C = 2, 8, 128
    logits = jax.random.normal(k1, (B, S, C), dtype=jnp.float32)
    labels = jax.nn.softmax(jax.random.normal(k2, (B, S, C), dtype=jnp.float32), axis=-1)
    loss = softmax_cross_entropy_with_logits(labels, logits)
    jax.block_until_ready(loss)
    ref = jnp.sum(-labels * jax.nn.log_softmax(logits, axis=-1), axis=-1)
    assert loss.shape == (B, S)
    assert jnp.allclose(loss, ref, atol=1e-5, rtol=1e-5), "f32 mismatch vs reference"

    # Case 2: bf16 inputs, ragged row count (N=15), single-block path.
    B2, S2 = 3, 5
    logits_bf = jax.random.normal(k3, (B2, S2, C), dtype=jnp.float32).astype(jnp.bfloat16)
    labels_bf = jax.nn.softmax(
        jax.random.normal(k4, (B2, S2, C), dtype=jnp.float32), axis=-1
    ).astype(jnp.bfloat16)
    loss_bf = softmax_cross_entropy_with_logits(labels_bf, logits_bf)
    jax.block_until_ready(loss_bf)
    ref_bf = jnp.sum(
        -labels_bf.astype(jnp.float32)
        * jax.nn.log_softmax(logits_bf.astype(jnp.float32), axis=-1),
        axis=-1,
    )
    assert loss_bf.shape == (B2, S2)
    assert loss_bf.dtype == jnp.bfloat16
    assert jnp.allclose(loss_bf.astype(jnp.float32), ref_bf, atol=2e-2, rtol=2e-2), (
        "bf16 mismatch vs reference"
    )

    # Case 3: multi-tile path with a ragged last block and C not a multiple of 128
    # (N=200 rows, tn forced to 128 -> grid of 2, last block has 72 valid rows).
    B3, S3, C3 = 25, 8, 32
    logits3 = jax.random.normal(k5, (B3, S3, C3), dtype=jnp.float32)
    labels3 = jax.nn.softmax(jax.random.normal(k6, (B3, S3, C3), dtype=jnp.float32), axis=-1)
    loss3 = softmax_cross_entropy_with_logits(labels3, logits3, tile_rows=128)
    jax.block_until_ready(loss3)
    ref3 = jnp.sum(-labels3 * jax.nn.log_softmax(logits3, axis=-1), axis=-1)
    assert loss3.shape == (B3, S3)
    assert jnp.allclose(loss3, ref3, atol=1e-5, rtol=1e-5), "ragged multi-tile mismatch"

    print("KERNEL_OK")
</pallas_src>

<mosaic_0001>
module attributes {stable_mosaic.version = 11 : i64} {
  func.func @_xent_kernel(%arg0: i32, %arg1: memref<16x128xf32, #tpu.memory_space<vmem>>, %arg2: memref<16x128xf32, #tpu.memory_space<vmem>>, %arg3: memref<1x16xf32, #tpu.memory_space<vmem>>) attributes {dimension_semantics = [#tpu.dimension_semantics<parallel>], iteration_bounds = array<i64: 1>, scalar_prefetch = 0 : i64, scratch_operands = 0 : i64, tpu.core_type = #tpu.core_type<tc>, window_params = [{transform_indices = @transform_0, window_bounds = array<i64: 16, 128>}, {transform_indices = @transform_1, window_bounds = array<i64: 16, 128>}, {transform_indices = @transform_2, window_bounds = array<i64: 1, 16>}]} {
    %c0 = arith.constant 0 : index
    %c0_0 = arith.constant 0 : index
    %0 = vector.load %arg1[%c0, %c0_0] : memref<16x128xf32, #tpu.memory_space<vmem>>, vector<16x128xf32>
    %c0_1 = arith.constant 0 : index
    %c0_2 = arith.constant 0 : index
    %1 = vector.load %arg2[%c0_1, %c0_2] : memref<16x128xf32, #tpu.memory_space<vmem>>, vector<16x128xf32>
    %cst = arith.constant dense<0xFF800000> : vector<16xf32>
    %2 = vector.multi_reduction <maximumf>, %1, %cst [1] : vector<16x128xf32> to vector<16xf32>
    %3 = vector.shape_cast %2 : vector<16xf32> to vector<16x1xf32>
    %4 = vector.broadcast %3 : vector<16x1xf32> to vector<16x128xf32>
    %5 = arith.subf %1, %4 : vector<16x128xf32>
    %6 = math.exp %5 : vector<16x128xf32>
    %cst_3 = arith.constant 1.000000e+00 : f32
    %7 = vector.broadcast %cst_3 : f32 to vector<1x128xf32>
    %cst_4 = arith.constant dense<0.000000e+00> : vector<1x16xf32>
    %8 = tpu.matmul %7, %6, %cst_4 {dimension_numbers = #tpu.dot_dimension_numbers<[1], [1], [0], [0], [0, 0, 1, 0], [], []>} : vector<1x128xf32>, vector<16x128xf32>, vector<1x16xf32> -> vector<1x16xf32>
    %9 = arith.mulf %0, %5 : vector<16x128xf32>
    %cst_5 = arith.constant dense<0.000000e+00> : vector<1x16xf32>
    %10 = tpu.matmul %7, %9, %cst_5 {dimension_numbers = #tpu.dot_dimension_numbers<[1], [1], [0], [0], [0, 0, 1, 0], [], []>} : vector<1x128xf32>, vector<16x128xf32>, vector<1x16xf32> -> vector<1x16xf32>
    %cst_6 = arith.constant 1.000000e+00 : f32
    %11 = vector.broadcast %cst_6 : f32 to vector<1x128xf32>
    %cst_7 = arith.constant dense<0.000000e+00> : vector<1x16xf32>
    %12 = tpu.matmul %11, %0, %cst_7 {dimension_numbers = #tpu.dot_dimension_numbers<[1], [1], [0], [0], [0, 0, 1, 0], [], []>} : vector<1x128xf32>, vector<16x128xf32>, vector<1x16xf32> -> vector<1x16xf32>
    %13 = math.log %8 : vector<1x16xf32>
    %14 = arith.mulf %12, %13 : vector<1x16xf32>
    %15 = arith.subf %14, %10 : vector<1x16xf32>
    %c0_8 = arith.constant 0 : index
    %c0_9 = arith.constant 0 : index
    %16 = vector.load %arg3[%c0_8, %c0_9] : memref<1x16xf32, #tpu.memory_space<vmem>>, vector<1x16xf32>
    tpu.vector_store %arg3[%c0_8, %c0_9], %15 {strides = array<i32>} : memref<1x16xf32, #tpu.memory_space<vmem>>, vector<1x16xf32>,
    return
  }
  func.func @transform_0(%arg0: i32) -> (i32, i32) {
    %c0_i32 = arith.constant 0 : i32
    %c0_i32_0 = arith.constant 0 : i32
    return %arg0, %c0_i32 : i32, i32
  }
  func.func @transform_1(%arg0: i32) -> (i32, i32) {
    %c0_i32 = arith.constant 0 : i32
    %c0_i32_0 = arith.constant 0 : i32
    return %arg0, %c0_i32 : i32, i32
  }
  func.func @transform_2(%arg0: i32) -> (i32, i32) {
    %c0_i32 = arith.constant 0 : i32
    %c0_i32_0 = arith.constant 0 : i32
    return %arg0, %c0_i32 : i32, i32
  }
}

</mosaic_0001>

<llo_original>
// kernel: tpu_custom_call.1
$region0: #{tpu_custom_call.1}
  #allocation0 [shape = 'u32[]', space=smem, size = 0x4, offset = 0x4, fixed_abs, tag = 'smem constant byte address 0x4 - core index']
  #allocation1 [shape = 'u32[144,128]{1,0:T(1,128)}', space=vmem, size = 0x12000, scoped, tag = 'internal scratch']
  %s0 = inlined_call_operand.hbm [shape: f32[16,128], index: 0, kind: input, shape index: {}]
  %s1 = inlined_call_operand.hbm [shape: f32[16,128], index: 1, kind: input, shape index: {}]
  %s2 = inlined_call_operand.hbm [shape: f32[1,16], index: 2, kind: output, shape index: {}]
  %s3 = sld [smem:[#allocation0]]
  $region26: #{tpu_custom_call.1} parent=0
    _
  %s5 = ssub.s32 1, %s3
  %s6 = scalar_select 0, %s5, %s3
  $region1: #{tpu_custom_call.1} parent=0
    #allocation2 [shape = 'u8[8192]{0}', space=vmem, size = 0x2000, scoped, tag = 'input window, operand 0, single buffered']
    #allocation3 [shape = 's32[1]{0}', space=sflag, size = 0x4, scoped, tag = 'scoped memory for tpu_custom_call.1']
    #allocation4 [shape = 's32[1]{0}', space=sflag, size = 0x4, scoped, tag = 'scoped memory for tpu_custom_call.1']
    #allocation5 [shape = 'u8[8192]{0}', space=vmem, size = 0x2000, scoped, tag = 'input window, operand 1, single buffered']
    #allocation6 [shape = 's32[1]{0}', space=sflag, size = 0x4, scoped, tag = 'scoped memory for tpu_custom_call.1']
    #allocation7 [shape = 'u8[512]{0}', space=vmem, size = 0x400, scoped, tag = 'output window, operand 0, single buffered']
    %7 = vsyncpa [#allocation3], 0
    %8 = vsyncpa [#allocation6], 0
    %9 = vsyncpa [#allocation4], 0
    // Predicated region
    $region2: #{tpu_custom_call.1} parent=1 // pred_check
      _
    $region3: #{tpu_custom_call.1} parent=1 // pred_check_branch
      %11 = sbr.rel (0) target = $region5
    $region4: #{tpu_custom_call.1} parent=1 // pred_region
      %s13 = ssub.s32 256, 256
      %14 = vsyncadd [#allocation3], %s13
      %s15 = sshll.u32 [#allocation2], 4
      %s16 = int_to_ptr.vmem [resolvable:$true] %s15
      %21 = dma.hbm_to_vmem [thread:$0]  %s0, 256, %s16, [#allocation3], 128, 128, 8
    $region5: #{tpu_custom_call.1} parent=1 // pred_fallthru
      _
    // Predicated region
    $region6: #{tpu_custom_call.1} parent=1 // pred_check
      _
    $region7: #{tpu_custom_call.1} parent=1 // pred_check_branch
      %23 = sbr.rel (0) target = $region9
    $region8: #{tpu_custom_call.1} parent=1 // pred_region
      %s25 = ssub.s32 256, 256
      %26 = vsyncadd [#allocation6], %s25
      %s27 = sshll.u32 [#allocation5], 4
      %s28 = int_to_ptr.vmem [resolvable:$true] %s27
      %33 = dma.hbm_to_vmem [thread:$0]  %s1, 256, %s28, [#allocation6], 128, 128, 8
    $region9: #{tpu_custom_call.1} parent=1 // pred_fallthru
      _
    // Predicated region
    $region10: #{tpu_custom_call.1} parent=1 // pred_check
      _
    $region11: #{tpu_custom_call.1} parent=1 // pred_check_branch
      %35 = sbr.rel (0) target = $region13
    $region12: #{tpu_custom_call.1} parent=1 // pred_region
      %36 = dma.done [#allocation3], 256
    $region13: #{tpu_custom_call.1} parent=1 // pred_fallthru
      _
    // Predicated region
    $region14: #{tpu_custom_call.1} parent=1 // pred_check
      _
    $region15: #{tpu_custom_call.1} parent=1 // pred_check_branch
      %38 = sbr.rel (0) target = $region17
    $region16: #{tpu_custom_call.1} parent=1 // pred_region
      %39 = dma.done [#allocation6], 256
    $region17: #{tpu_custom_call.1} parent=1 // pred_fallthru
      _
    %v40 = vld [vmem:[#allocation2] sm:$0xff]
    %v41 = vld [vmem:[#allocation2 + $0x8] sm:$0xff]
    %v42 = vld [vmem:[#allocation5] sm:$0xff]
    %v43 = vld [vmem:[#allocation5 + $0x8] sm:$0xff]
    %44 = vmax.xlane.f32.xlu0 %v42
    %v45 = vpop.xlane.xlu0 %44
    %46 = vmax.xlane.f32.xlu0 %v43
    %v47 = vpop.xlane.xlu0 %46
    %v48 = vsub.f32 %v42, %v45
    %v49 = vsub.f32 %v43, %v47
    %v50 = vmul.f32 %v48, 1.442695
    %v51 = vpow.pop %v50
    %v52 = vmul.f32 %v49, 1.442695
    %v53 = vpow.pop %v52
    %54 = vmatprep.subr.mxu0 0.0
    %55 = vmatpush1.xpose.msra.mxu0 %v51
    %56 = vmatprep.subr.mxu0 0.0
    %57 = vmatpush1.xpose.msra.mxu0 %v53
    %58 = vmatprep.subr.mxu0 0.0
    %59 = vmatpush1.xpose.msra.mxu0 0.0
    %60 = vmatprep.subr.mxu0 0.0
    %61 = vmatpush1.xpose.msra.mxu0 0.0
    %62 = vmatprep.subr.mxu0 0.0
    %63 = vmatpush1.xpose.msra.mxu0 0.0
    %64 = vmatprep.subr.mxu0 0.0
    %65 = vmatpush1.xpose.msra.mxu0 0.0
    %66 = vmatprep.subr.mxu0 0.0
    %67 = vmatpush1.xpose.msra.mxu0 0.0
    %68 = vmatprep.subr.mxu0 0.0
    %69 = vmatpush1.xpose.msra.mxu0 0.0
    %70 = vmatprep.subr.mxu0 0.0
    %71 = vmatpush1.xpose.msra.mxu0 0.0
    %72 = vmatprep.subr.mxu0 0.0
    %73 = vmatpush1.xpose.msra.mxu0 0.0
    %74 = vmatprep.subr.mxu0 0.0
    %75 = vmatpush1.xpose.msra.mxu0 0.0
    %76 = vmatprep.subr.mxu0 0.0
    %77 = vmatpush1.xpose.msra.mxu0 0.0
    %78 = vmatprep.subr.mxu0 0.0
    %79 = vmatpush1.xpose.msra.mxu0 0.0
    %80 = vmatprep.subr.mxu0 0.0
    %81 = vmatpush1.xpose.msra.mxu0 0.0
    %82 = vmatprep.subr.mxu0 0.0
    %83 = vmatpush1.xpose.msra.mxu0 0.0
    %84 = vmatprep.subr.mxu0 0.0
    %85 = vmatpush1.xpose.msra.mxu0 0.0
    %86 = vmatprep.subr.mxu0 0.0
    %87 = vmatpush1.xpose.msra.mxu0 0.0
    %88 = vmatprep.subr.mxu0 0.0
    %89 = vmatpush1.xpose.msra.mxu0 0.0
    %90 = vmatprep.subr.mxu0 0.0
    %91 = vmatpush1.xpose.msra.mxu0 0.0
    %92 = vmatprep.subr.mxu0 0.0
    %93 = vmatpush1.xpose.msra.mxu0 0.0
    %94 = vmatprep.subr.mxu0 0.0
    %95 = vmatpush1.xpose.msra.mxu0 0.0
    %96 = vmatprep.subr.mxu0 0.0
    %97 = vmatpush1.xpose.msra.mxu0 0.0
    %98 = vmatprep.subr.mxu0 0.0
    %99 = vmatpush1.xpose.msra.mxu0 0.0
    %100 = vmatprep.subr.mxu0 0.0
    %101 = vmatpush1.xpose.msra.mxu0 0.0
    %102 = vmatprep.subr.mxu0 0.0
    %103 = vmatpush1.xpose.msra.mxu0 0.0
    %104 = vmatprep.subr.mxu0 0.0
    %105 = vmatpush1.xpose.msra.mxu0 0.0
    %106 = vmatprep.subr.mxu0 0.0
    %107 = vmatpush1.xpose.msra.mxu0 0.0
    %108 = vmatprep.subr.mxu0 0.0
    %109 = vmatpush1.xpose.msra.mxu0 0.0
    %110 = vmatprep.subr.mxu0 0.0
    %111 = vmatpush1.xpose.msra.mxu0 0.0
    %112 = vmatprep.subr.mxu0 0.0
    %113 = vmatpush1.xpose.msra.mxu0 0.0
    %114 = vmatprep.subr.mxu0 0.0
    %115 = vmatpush1.xpose.msra.mxu0 0.0
    %116 = vmatprep.subr.mxu0 0.0
    %117 = vmatpush1.xpose.msra.mxu0 0.0
    %118 = vmatprep.mubr.f32.mxu0 0.0
    %119 = vmatmul.mubr.f32.gmra.mrb[0].mxu0 1.0
    %v120 = vpop.f32.mrb[0].mxu0
    %v121 = vadd.f32 0.0, %v120
    %v122 = vpop.f32.mrb[0].mxu0
    %123 = vdwg.mxu0
    %v124 = vmul.f32 %v40, %v48
    %v125 = vmul.f32 %v41, %v49
    %126 = vmatprep.subr.mxu0 0.0
    %127 = vmatpush1.xpose.msra.mxu0 %v124
    %128 = vmatprep.subr.mxu0 0.0
    %129 = vmatpush1.xpose.msra.mxu0 %v125
    %130 = vmatprep.subr.mxu0 0.0
    %131 = vmatpush1.xpose.msra.mxu0 0.0
    %132 = vmatprep.subr.mxu0 0.0
    %133 = vmatpush1.xpose.msra.mxu0 0.0
    %134 = vmatprep.subr.mxu0 0.0
    %135 = vmatpush1.xpose.msra.mxu0 0.0
    %136 = vmatprep.subr.mxu0 0.0
    %137 = vmatpush1.xpose.msra.mxu0 0.0
    %138 = vmatprep.subr.mxu0 0.0
    %139 = vmatpush1.xpose.msra.mxu0 0.0
    %140 = vmatprep.subr.mxu0 0.0
    %141 = vmatpush1.xpose.msra.mxu0 0.0
    %142 = vmatprep.subr.mxu0 0.0
    %143 = vmatpush1.xpose.msra.mxu0 0.0
    %144 = vmatprep.subr.mxu0 0.0
    %145 = vmatpush1.xpose.msra.mxu0 0.0
    %146 = vmatprep.subr.mxu0 0.0
    %147 = vmatpush1.xpose.msra.mxu0 0.0
    %148 = vmatprep.subr.mxu0 0.0
    %149 = vmatpush1.xpose.msra.mxu0 0.0
    %150 = vmatprep.subr.mxu0 0.0
    %151 = vmatpush1.xpose.msra.mxu0 0.0
    %152 = vmatprep.subr.mxu0 0.0
    %153 = vmatpush1.xpose.msra.mxu0 0.0
    %154 = vmatprep.subr.mxu0 0.0
    %155 = vmatpush1.xpose.msra.mxu0 0.0
    %156 = vmatprep.subr.mxu0 0.0
    %157 = vmatpush1.xpose.msra.mxu0 0.0
    %158 = vmatprep.subr.mxu0 0.0
    %159 = vmatpush1.xpose.msra.mxu0 0.0
    %160 = vmatprep.subr.mxu0 0.0
    %161 = vmatpush1.xpose.msra.mxu0 0.0
    %162 = vmatprep.subr.mxu0 0.0
    %163 = vmatpush1.xpose.msra.mxu0 0.0
    %164 = vmatprep.subr.mxu0 0.0
    %165 = vmatpush1.xpose.msra.mxu0 0.0
    %166 = vmatprep.subr.mxu0 0.0
    %167 = vmatpush1.xpose.msra.mxu0 0.0
    %168 = vmatprep.subr.mxu0 0.0
    %169 = vmatpush1.xpose.msra.mxu0 0.0
    %170 = vmatprep.subr.mxu0 0.0
    %171 = vmatpush1.xpose.msra.mxu0 0.0
    %172 = vmatprep.subr.mxu0 0.0
    %173 = vmatpush1.xpose.msra.mxu0 0.0
    %174 = vmatprep.subr.mxu0 0.0
    %175 = vmatpush1.xpose.msra.mxu0 0.0
    %176 = vmatprep.subr.mxu0 0.0
    %177 = vmatpush1.xpose.msra.mxu0 0.0
    %178 = vmatprep.subr.mxu0 0.0
    %179 = vmatpush1.xpose.msra.mxu0 0.0
    %180 = vmatprep.subr.mxu0 0.0
    %181 = vmatpush1.xpose.msra.mxu0 0.0
    %182 = vmatprep.subr.mxu0 0.0
    %183 = vmatpush1.xpose.msra.mxu0 0.0
    %184 = vmatprep.subr.mxu0 0.0
    %185 = vmatpush1.xpose.msra.mxu0 0.0
    %186 = vmatprep.subr.mxu0 0.0
    %187 = vmatpush1.xpose.msra.mxu0 0.0
    %188 = vmatprep.subr.mxu0 0.0
    %189 = vmatpush1.xpose.msra.mxu0 0.0
    %190 = vmatprep.mubr.f32.mxu0 0.0
    %191 = vmatmul.mubr.f32.gmra.mrb[0].mxu0 1.0
    %v192 = vpop.f32.mrb[0].mxu0
    %v193 = vadd.f32 0.0, %v192
    %v194 = vpop.f32.mrb[0].mxu0
    %195 = vdwg.mxu0
    %196 = vmatprep.subr.mxu0 0.0
    %197 = vmatpush1.xpose.msra.mxu0 %v40
    %198 = vmatprep.subr.mxu0 0.0
    %199 = vmatpush1.xpose.msra.mxu0 %v41
    %200 = vmatprep.subr.mxu0 0.0
    %201 = vmatpush1.xpose.msra.mxu0 0.0
    %202 = vmatprep.subr.mxu0 0.0
    %203 = vmatpush1.xpose.msra.mxu0 0.0
    %204 = vmatprep.subr.mxu0 0.0
    %205 = vmatpush1.xpose.msra.mxu0 0.0
    %206 = vmatprep.subr.mxu0 0.0
    %207 = vmatpush1.xpose.msra.mxu0 0.0
    %208 = vmatprep.subr.mxu0 0.0
    %209 = vmatpush1.xpose.msra.mxu0 0.0
    %210 = vmatprep.subr.mxu0 0.0
    %211 = vmatpush1.xpose.msra.mxu0 0.0
    %212 = vmatprep.subr.mxu0 0.0
    %213 = vmatpush1.xpose.msra.mxu0 0.0
    %214 = vmatprep.subr.mxu0 0.0
    %215 = vmatpush1.xpose.msra.mxu0 0.0
    %216 = vmatprep.subr.mxu0 0.0
    %217 = vmatpush1.xpose.msra.mxu0 0.0
    %218 = vmatprep.subr.mxu0 0.0
    %219 = vmatpush1.xpose.msra.mxu0 0.0
    %220 = vmatprep.subr.mxu0 0.0
    %221 = vmatpush1.xpose.msra.mxu0 0.0
    %222 = vmatprep.subr.mxu0 0.0
    %223 = vmatpush1.xpose.msra.mxu0 0.0
    %224 = vmatprep.subr.mxu0 0.0
    %225 = vmatpush1.xpose.msra.mxu0 0.0
    %226 = vmatprep.subr.mxu0 0.0
    %227 = vmatpush1.xpose.msra.mxu0 0.0
    %228 = vmatprep.subr.mxu0 0.0
    %229 = vmatpush1.xpose.msra.mxu0 0.0
    %230 = vmatprep.subr.mxu0 0.0
    %231 = vmatpush1.xpose.msra.mxu0 0.0
    %232 = vmatprep.subr.mxu0 0.0
    %233 = vmatpush1.xpose.msra.mxu0 0.0
    %234 = vmatprep.subr.mxu0 0.0
    %235 = vmatpush1.xpose.msra.mxu0 0.0
    %236 = vmatprep.subr.mxu0 0.0
    %237 = vmatpush1.xpose.msra.mxu0 0.0
    %238 = vmatprep.subr.mxu0 0.0
    %239 = vmatpush1.xpose.msra.mxu0 0.0
    %240 = vmatprep.subr.mxu0 0.0
    %241 = vmatpush1.xpose.msra.mxu0 0.0
    %242 = vmatprep.subr.mxu0 0.0
    %243 = vmatpush1.xpose.msra.mxu0 0.0
    %244 = vmatprep.subr.mxu0 0.0
    %245 = vmatpush1.xpose.msra.mxu0 0.0
    %246 = vmatprep.subr.mxu0 0.0
    %247 = vmatpush1.xpose.msra.mxu0 0.0
    %248 = vmatprep.subr.mxu0 0.0
    %249 = vmatpush1.xpose.msra.mxu0 0.0
    %250 = vmatprep.subr.mxu0 0.0
    %251 = vmatpush1.xpose.msra.mxu0 0.0
    %252 = vmatprep.subr.mxu0 0.0
    %253 = vmatpush1.xpose.msra.mxu0 0.0
    %254 = vmatprep.subr.mxu0 0.0
    %255 = vmatpush1.xpose.msra.mxu0 0.0
    %256 = vmatprep.subr.mxu0 0.0
    %257 = vmatpush1.xpose.msra.mxu0 0.0
    %258 = vmatprep.subr.mxu0 0.0
    %259 = vmatpush1.xpose.msra.mxu0 0.0
    %260 = vmatprep.mubr.f32.mxu0 0.0
    %261 = vmatmul.mubr.f32.gmra.mrb[0].mxu0 1.0
    %v262 = vpop.f32.mrb[0].mxu0
    %v263 = vadd.f32 0.0, %v262
    %v264 = vpop.f32.mrb[0].mxu0
    %265 = vdwg.mxu0
    %v266 = vlog2.pop %v121
    %v267 = vmul.f32 %v266, 0.6931472
    %v268 = vmul.f32 %v263, %v267
    %v269 = vsub.f32 %v268, %v193
    %vm270 = vcmask 122880
    %271 = vst.msk [vmem:[#allocation7] sm:$0x1] %vm270, %v269
    // Predicated region
    $region18: #{tpu_custom_call.1} parent=1 // pred_check
      _
    $region19: #{tpu_custom_call.1} parent=1 // pred_check_branch
      %273 = sbr.rel (0) target = $region21
    $region20: #{tpu_custom_call.1} parent=1 // pred_region
      %s275 = ssub.s32 16, 16
      %276 = vsyncadd [#allocation4], %s275
      %s278 = sshll.u32 [#allocation7], 4
      %s279 = int_to_ptr.vmem [resolvable:$true] %s278
      %281 = dma.vmem_to_hbm [thread:$0]  %s279, 16, %s2, [#allocation4]
    $region21: #{tpu_custom_call.1} parent=1 // pred_fallthru
      _
    // Predicated region
    $region22: #{tpu_custom_call.1} parent=1 // pred_check
      _
    $region23: #{tpu_custom_call.1} parent=1 // pred_check_branch
      %283 = sbr.rel (0) target = $region25
    $region24: #{tpu_custom_call.1} parent=1 // pred_region
      %284 = dma.done [#allocation4], 16
    $region25: #{tpu_custom_call.1} parent=1 // pred_fallthru
      _
    %285 = vsyncpa [#allocation3], 1
    %286 = vsyncpa [#allocation6], 1
    %287 = vsyncpa [#allocation4], 1

</llo_original>
